<compile_context>
chip_gen: v7x
topology: tpu7x:2x2x1
jax: 0.10.0
libtpu: 0.0.40
codegen_flags: <defaults>
</compile_context>

<pallas_src>
import functools

import jax
import jax.numpy as jnp
from jax.experimental import pallas as pl
from jax.experimental.pallas import tpu as pltpu


def _masked_ce_kernel(logits_ref, target_ref, wrow_ref, num_ref, den_ref,
                      m_sc, s_sc, p_sc):
    """One (batch-tile, class-tile) grid step with an online log-sum-exp."""
    j = pl.program_id(1)
    tc = logits_ref.shape[-1]

    @pl.when(j == 0)
    def _init():
        m_sc[...] = jnp.full_like(m_sc, -jnp.inf)
        s_sc[...] = jnp.zeros_like(s_sc)
        p_sc[...] = jnp.zeros_like(p_sc)

    x = logits_ref[...]                      # (tb, tc) native dtype (bf16 stays bf16)
    tgt = target_ref[...]                    # (tb, 1) int32 (-1 for masked/padded rows)

    # Target predicate via 2-D iota offset by this class tile's global column start.
    col = jax.lax.broadcasted_iota(jnp.int32, x.shape, dimension=1) + j * tc
    pred = col == tgt                        # (tb, tc) bool

    # x[target] restricted to this tile (exact: at most one non-zero per row).
    picked = jnp.sum(jnp.where(pred, x, jnp.zeros_like(x)), axis=-1, keepdims=True)
    p_sc[...] = p_sc[...] + picked.astype(jnp.float32)

    # Online log-sum-exp. The running max is always an exactly-representable
    # native-dtype value, so the native-dtype (x - m) subtraction is consistent;
    # only exp and the running accumulations run in f32.
    tile_max = jnp.max(x, axis=-1, keepdims=True).astype(jnp.float32)
    m_new = jnp.maximum(m_sc[...], tile_max)
    shifted = (x - m_new.astype(x.dtype)).astype(jnp.float32)
    s_sc[...] = (s_sc[...] * jnp.exp(m_sc[...] - m_new)
                 + jnp.sum(jnp.exp(shifted), axis=-1, keepdims=True))
    m_sc[...] = m_new

    @pl.when(j == pl.num_programs(1) - 1)
    def _finalize():
        wm = wrow_ref[...]                   # (tb, 1) f32: mask * weight[target]
        nll = (m_sc[...] + jnp.log(s_sc[...])) - p_sc[...]
        # Rows dropped by the mask (wm == 0) must not poison the sums even if their
        # nll is non-finite (torch.masked_select removes them before the CE).
        nll = jnp.where(wm != 0.0, nll, 0.0)
        num = jnp.sum(wm * nll)
        den = jnp.sum(wm)
        # Lane-dense (1, 1, 128) partial blocks; summed (and de-replicated) in wrapper.
        num_ref[...] = jnp.broadcast_to(num, num_ref.shape)
        den_ref[...] = jnp.broadcast_to(den, den_ref.shape)


def _vmem_capacity_bytes():
    try:
        info = pltpu.get_tpu_info()
        return int(getattr(info, "vmem_capacity_bytes", 128 << 20))
    except Exception:                        # interpret mode / unavailable runtime
        return 128 << 20


def _pick_config(b, c, itemsize):
    """Generation-aware (tb, tc, vmem_limit_bytes).

    Per-tile VMEM model: 2*tb*tc*itemsize (double-buffered logits stream) plus
    ~2*tb*tc*4 bytes of f32 temporaries (shifted copy for exp, exp result).
    (tb, 1) side inputs, (1, 128) outputs and scratch are negligible.
    """
    cap = _vmem_capacity_bytes()
    if cap <= (64 << 20):                    # v7x: 64 MiB per TensorCore
        vmem_limit = 48 << 20
    else:                                    # v5e / v6e: 128 MiB
        vmem_limit = 96 << 20
    work_budget = (vmem_limit * 3) // 5      # headroom for outputs / scratch / spills

    bytes_per_elem = 2 * itemsize + 8
    cp = -(-c // 128) * 128                  # lane-pad the class dim

    # Split the class axis (online LSE) only when a full-C block would force a tiny
    # batch tile (LLM-vocab-sized C); otherwise keep a single class tile.
    want_tb = 256
    tc = cp
    if cp * bytes_per_elem * want_tb > work_budget and cp > 1024:
        tc = (work_budget // (want_tb * bytes_per_elem)) // 128 * 128
        tc = int(min(cp, max(1024, tc)))

    tb = work_budget // (tc * bytes_per_elem)
    tb = min(int(tb), 1024, -(-b // 16) * 16)
    tb = max(16, (tb // 16) * 16)            # multiple of 16: legal sublanes, bf16-safe
    return tb, int(tc), vmem_limit


@functools.partial(jax.jit,
                   static_argnames=("reduction", "tb", "tc", "vmem_limit_bytes"))
def _masked_ce_pallas(logits, target, mask, weight, *, reduction, tb, tc,
                      vmem_limit_bytes):
    if reduction not in ("mean", "sum"):
        # TODO(synk): reduction='none' needs a dynamic-length per-row output
        # (masked_select); only 'mean' and 'sum' are supported.
        raise NotImplementedError(f"reduction={reduction!r} not supported")

    b, c = logits.shape

    # Wrapper-side per-row weight with the mask folded in: wm = mask * weight[target].
    tgt = target.astype(jnp.int32)
    msk = mask.astype(jnp.bool_)
    w_row = jnp.take(weight.astype(jnp.float32), jnp.clip(tgt, 0, c - 1))
    wm = jnp.where(msk, w_row, 0.0)
    tgt = jnp.where(msk, tgt, -1)            # masked rows never match any class column

    gb = -(-b // tb)
    gc = -(-c // tc)
    bp, cp = gb * tb, gc * tc

    if cp != c:                              # lane-pad class dim with a huge negative
        fill = float(jnp.finfo(logits.dtype).min)
        logits = jnp.pad(logits, ((0, 0), (0, cp - c)), constant_values=fill)
    if bp != b:                              # pad tail rows; wm == 0 keeps them inert
        logits = jnp.pad(logits, ((0, bp - b), (0, 0)))
        tgt = jnp.pad(tgt, (0, bp - b), constant_values=-1)
        wm = jnp.pad(wm, (0, bp - b))

    target2d = tgt.reshape(bp, 1)
    wm2d = wm.reshape(bp, 1)

    num_parts, den_parts = pl.pallas_call(
        _masked_ce_kernel,
        out_shape=(
            jax.ShapeDtypeStruct((gb, 1, 128), jnp.float32),
            jax.ShapeDtypeStruct((gb, 1, 128), jnp.float32),
        ),
        grid_spec=pltpu.PrefetchScalarGridSpec(
            num_scalar_prefetch=0,
            grid=(gb, gc),                                     # reduction axis last
            in_specs=[
                pl.BlockSpec((tb, tc), lambda i, j: (i, j)),   # logits (native dtype)
                pl.BlockSpec((tb, 1), lambda i, j: (i, 0)),    # targets
                pl.BlockSpec((tb, 1), lambda i, j: (i, 0)),    # mask * weight[target]
            ],
            out_specs=[
                pl.BlockSpec((1, 1, 128), lambda i, j: (i, 0, 0)),  # per-tile num
                pl.BlockSpec((1, 1, 128), lambda i, j: (i, 0, 0)),  # per-tile den
            ],
            scratch_shapes=[pltpu.VMEM((tb, 1), jnp.float32)] * 3,  # m, s, picked
        ),
        compiler_params=pltpu.CompilerParams(
            dimension_semantics=("parallel", "arbitrary"),
            vmem_limit_bytes=vmem_limit_bytes,
        ),
    )(logits, target2d, wm2d)

    # Each scalar partial is replicated across 128 lanes; the factor cancels for
    # 'mean' and is divided out exactly (power of two) for 'sum'.
    num = jnp.sum(num_parts) * (1.0 / 128.0)
    den = jnp.sum(den_parts) * (1.0 / 128.0)
    return num / den if reduction == "mean" else num


def masked_cross_entropy_loss(logits, target, mask, weight, reduction="mean",
                              *, validate_mask=False):
    """JAX/Pallas equivalent of MaskedCrossEntropyLoss.forward.

    An all-zero mask yields NaN (den == 0) under jit; pass validate_mask=True
    (eager only) to reproduce PyTorch's ValueError at the cost of a device sync.
    """
    if validate_mask:
        # TODO(synk): eager-only check; forces a host-device round trip.
        if not bool(jnp.any(mask != 0)):
            raise ValueError("Mask in MaskedCrossEntropyLoss is all zeros.")

    b, c = logits.shape
    tb, tc, vmem_limit = _pick_config(b, c, jnp.dtype(logits.dtype).itemsize)
    return _masked_ce_pallas(logits, target, mask, weight, reduction=reduction,
                             tb=tb, tc=tc, vmem_limit_bytes=vmem_limit)


def _reference(logits, target, mask, weight):
    # Pure-JAX reference (same math as torch masked_select + weighted CE mean).
    logits = logits.astype(jnp.float32)
    logp = jax.nn.log_softmax(logits, axis=-1)
    nll = -jnp.take_along_axis(logp, target[:, None].astype(jnp.int32), axis=-1)[:, 0]
    w_row = weight.astype(jnp.float32)[target]
    m = mask.astype(jnp.float32)
    return jnp.sum(m * w_row * nll) / jnp.sum(m * w_row)


if __name__ == "__main__":
    key = jax.random.PRNGKey(0)
    k1, k2, k3, k4 = jax.random.split(key, 4)

    # Primary check: small f32 problem.
    B, C = 16, 32
    logits = jax.random.normal(k1, (B, C), dtype=jnp.float32)
    target = jax.random.randint(k2, (B,), 0, C, dtype=jnp.int32)
    mask = jax.random.bernoulli(k3, p=0.6, shape=(B,))
    weight = jax.random.uniform(k4, (C,), minval=0.5, maxval=1.5, dtype=jnp.float32)

    loss = jax.block_until_ready(
        masked_cross_entropy_loss(logits, target, mask, weight, reduction="mean"))
    ref = _reference(logits, target, mask, weight)
    assert jnp.allclose(loss, ref, rtol=1e-5, atol=1e-5), (loss, ref)

    # Secondary check: C not a multiple of 128 (exercises the lane-padding path).
    B2, C2 = 24, 130
    k5, k6, k7, k8 = jax.random.split(jax.random.PRNGKey(1), 4)
    logits2 = jax.random.normal(k5, (B2, C2), dtype=jnp.float32)
    target2 = jax.random.randint(k6, (B2,), 0, C2, dtype=jnp.int32)
    mask2 = jax.random.bernoulli(k7, p=0.5, shape=(B2,))
    weight2 = jax.random.uniform(k8, (C2,), minval=0.5, maxval=1.5, dtype=jnp.float32)
    loss2 = jax.block_until_ready(
        masked_cross_entropy_loss(logits2, target2, mask2, weight2))
    ref2 = _reference(logits2, target2, mask2, weight2)
    assert jnp.allclose(loss2, ref2, rtol=1e-5, atol=1e-5), (loss2, ref2)

    # bf16 streaming path (select/compare/max/sub in bf16, exp/accumulate in f32).
    loss3 = jax.block_until_ready(
        masked_cross_entropy_loss(logits.astype(jnp.bfloat16), target, mask, weight))
    ref3 = _reference(logits.astype(jnp.bfloat16), target, mask, weight)
    assert jnp.allclose(loss3, ref3, rtol=5e-2, atol=5e-2), (loss3, ref3)

    print("KERNEL_OK")
</pallas_src>

<mosaic_0001>
module attributes {stable_mosaic.version = 11 : i64} {
  func.func @_masked_ce_kernel(%arg0: i32, %arg1: i32, %arg2: memref<16x128xf32, #tpu.memory_space<vmem>>, %arg3: memref<16x1xi32, #tpu.memory_space<vmem>>, %arg4: memref<16x1xf32, #tpu.memory_space<vmem>>, %arg5: memref<1x1x128xf32, #tpu.memory_space<vmem>>, %arg6: memref<1x1x128xf32, #tpu.memory_space<vmem>>, %arg7: memref<16x1xf32, #tpu.memory_space<vmem>>, %arg8: memref<16x1xf32, #tpu.memory_space<vmem>>, %arg9: memref<16x1xf32, #tpu.memory_space<vmem>>) attributes {dimension_semantics = [#tpu.dimension_semantics<parallel>, #tpu.dimension_semantics<arbitrary>], iteration_bounds = array<i64: 1, 1>, scalar_prefetch = 0 : i64, scratch_operands = 3 : i64, tpu.core_type = #tpu.core_type<tc>, window_params = [{transform_indices = @transform_0, window_bounds = array<i64: 16, 128>}, {transform_indices = @transform_1, window_bounds = array<i64: 16, 1>}, {transform_indices = @transform_2, window_bounds = array<i64: 16, 1>}, {transform_indices = @transform_3, window_bounds = array<i64: 1, 1, 128>}, {transform_indices = @transform_4, window_bounds = array<i64: 1, 1, 128>}]} {
    %c0_i32 = arith.constant 0 : i32
    %0 = arith.cmpi eq, %arg1, %c0_i32 : i32
    %1 = arith.extui %0 : i1 to i32
    %c0_i32_0 = arith.constant 0 : i32
    %2 = arith.cmpi ne, %1, %c0_i32_0 : i32
    scf.if %2 {
      %cst_23 = arith.constant 0xFF800000 : f32
      %38 = vector.broadcast %cst_23 : f32 to vector<16x1xf32>
      %c0_24 = arith.constant 0 : index
      %c0_25 = arith.constant 0 : index
      %39 = vector.load %arg7[%c0_24, %c0_25] : memref<16x1xf32, #tpu.memory_space<vmem>>, vector<16x1xf32>
      tpu.vector_store %arg7[%c0_24, %c0_25], %38 {strides = array<i32>} : memref<16x1xf32, #tpu.memory_space<vmem>>, vector<16x1xf32>,
      %cst_26 = arith.constant 0.000000e+00 : f32
      %40 = vector.broadcast %cst_26 : f32 to vector<16x1xf32>
      %c0_27 = arith.constant 0 : index
      %c0_28 = arith.constant 0 : index
      %41 = vector.load %arg8[%c0_27, %c0_28] : memref<16x1xf32, #tpu.memory_space<vmem>>, vector<16x1xf32>
      tpu.vector_store %arg8[%c0_27, %c0_28], %40 {strides = array<i32>} : memref<16x1xf32, #tpu.memory_space<vmem>>, vector<16x1xf32>,
      %cst_29 = arith.constant 0.000000e+00 : f32
      %42 = vector.broadcast %cst_29 : f32 to vector<16x1xf32>
      %c0_30 = arith.constant 0 : index
      %c0_31 = arith.constant 0 : index
      %43 = vector.load %arg9[%c0_30, %c0_31] : memref<16x1xf32, #tpu.memory_space<vmem>>, vector<16x1xf32>
      tpu.vector_store %arg9[%c0_30, %c0_31], %42 {strides = array<i32>} : memref<16x1xf32, #tpu.memory_space<vmem>>, vector<16x1xf32>,
    } else {
    }
    %c0 = arith.constant 0 : index
    %c0_1 = arith.constant 0 : index
    %3 = vector.load %arg2[%c0, %c0_1] : memref<16x128xf32, #tpu.memory_space<vmem>>, vector<16x128xf32>
    %c0_2 = arith.constant 0 : index
    %c0_3 = arith.constant 0 : index
    %4 = vector.load %arg3[%c0_2, %c0_3] : memref<16x1xi32, #tpu.memory_space<vmem>>, vector<16x1xi32>
    %5 = tpu.iota {dimensions = array<i32: 1>} : vector<16x128xi32>
    %c128_i32 = arith.constant 128 : i32
    %6 = arith.muli %arg1, %c128_i32 : i32
    %7 = vector.broadcast %6 : i32 to vector<16x128xi32>
    %8 = arith.addi %5, %7 : vector<16x128xi32>
    %9 = vector.broadcast %4 : vector<16x1xi32> to vector<16x128xi32>
    %10 = arith.cmpi eq, %8, %9 : vector<16x128xi32>
    %cst = arith.constant 0.000000e+00 : f32
    %11 = vector.broadcast %cst : f32 to vector<16x128xf32>
    %12 = arith.select %10, %3, %11 : vector<16x128xi1>, vector<16x128xf32>
    %cst_4 = arith.constant dense<0.000000e+00> : vector<16xf32>
    %13 = vector.multi_reduction <add>, %12, %cst_4 [1] : vector<16x128xf32> to vector<16xf32>
    %14 = vector.shape_cast %13 : vector<16xf32> to vector<16x1xf32>
    %c0_5 = arith.constant 0 : index
    %c0_6 = arith.constant 0 : index
    %15 = vector.load %arg9[%c0_5, %c0_6] : memref<16x1xf32, #tpu.memory_space<vmem>>, vector<16x1xf32>
    %16 = arith.addf %15, %14 : vector<16x1xf32>
    %c0_7 = arith.constant 0 : index
    %c0_8 = arith.constant 0 : index
    %17 = vector.load %arg9[%c0_7, %c0_8] : memref<16x1xf32, #tpu.memory_space<vmem>>, vector<16x1xf32>
    tpu.vector_store %arg9[%c0_7, %c0_8], %16 {strides = array<i32>} : memref<16x1xf32, #tpu.memory_space<vmem>>, vector<16x1xf32>,
    %cst_9 = arith.constant dense<0xFF800000> : vector<16xf32>
    %18 = vector.multi_reduction <maximumf>, %3, %cst_9 [1] : vector<16x128xf32> to vector<16xf32>
    %19 = vector.shape_cast %18 : vector<16xf32> to vector<16x1xf32>
    %c0_10 = arith.constant 0 : index
    %c0_11 = arith.constant 0 : index
    %20 = vector.load %arg7[%c0_10, %c0_11] : memref<16x1xf32, #tpu.memory_space<vmem>>, vector<16x1xf32>
    %21 = arith.maximumf %20, %19 : vector<16x1xf32>
    %22 = vector.broadcast %21 : vector<16x1xf32> to vector<16x128xf32>
    %23 = arith.subf %3, %22 : vector<16x128xf32>
    %c0_12 = arith.constant 0 : index
    %c0_13 = arith.constant 0 : index
    %24 = vector.load %arg8[%c0_12, %c0_13] : memref<16x1xf32, #tpu.memory_space<vmem>>, vector<16x1xf32>
    %c0_14 = arith.constant 0 : index
    %c0_15 = arith.constant 0 : index
    %25 = vector.load %arg7[%c0_14, %c0_15] : memref<16x1xf32, #tpu.memory_space<vmem>>, vector<16x1xf32>
    %26 = arith.subf %25, %21 : vector<16x1xf32>
    %27 = math.exp %26 : vector<16x1xf32>
    %28 = arith.mulf %24, %27 : vector<16x1xf32>
    %29 = math.exp %23 : vector<16x128xf32>
    %cst_16 = arith.constant dense<0.000000e+00> : vector<16xf32>
    %30 = vector.multi_reduction <add>, %29, %cst_16 [1] : vector<16x128xf32> to vector<16xf32>
    %31 = vector.shape_cast %30 : vector<16xf32> to vector<16x1xf32>
    %32 = arith.addf %28, %31 : vector<16x1xf32>
    %c0_17 = arith.constant 0 : index
    %c0_18 = arith.constant 0 : index
    %33 = vector.load %arg8[%c0_17, %c0_18] : memref<16x1xf32, #tpu.memory_space<vmem>>, vector<16x1xf32>
    tpu.vector_store %arg8[%c0_17, %c0_18], %32 {strides = array<i32>} : memref<16x1xf32, #tpu.memory_space<vmem>>, vector<16x1xf32>,
    %c0_19 = arith.constant 0 : index
    %c0_20 = arith.constant 0 : index
    %34 = vector.load %arg7[%c0_19, %c0_20] : memref<16x1xf32, #tpu.memory_space<vmem>>, vector<16x1xf32>
    tpu.vector_store %arg7[%c0_19, %c0_20], %21 {strides = array<i32>} : memref<16x1xf32, #tpu.memory_space<vmem>>, vector<16x1xf32>,
    %c0_i32_21 = arith.constant 0 : i32
    %35 = arith.cmpi eq, %arg1, %c0_i32_21 : i32
    %36 = arith.extui %35 : i1 to i32
    %c0_i32_22 = arith.constant 0 : i32
    %37 = arith.cmpi ne, %36, %c0_i32_22 : i32
    scf.if %37 {
      %c0_23 = arith.constant 0 : index
      %c0_24 = arith.constant 0 : index
      %38 = vector.load %arg4[%c0_23, %c0_24] : memref<16x1xf32, #tpu.memory_space<vmem>>, vector<16x1xf32>
      %c0_25 = arith.constant 0 : index
      %c0_26 = arith.constant 0 : index
      %39 = vector.load %arg7[%c0_25, %c0_26] : memref<16x1xf32, #tpu.memory_space<vmem>>, vector<16x1xf32>
      %c0_27 = arith.constant 0 : index
      %c0_28 = arith.constant 0 : index
      %40 = vector.load %arg8[%c0_27, %c0_28] : memref<16x1xf32, #tpu.memory_space<vmem>>, vector<16x1xf32>
      %41 = math.log %40 : vector<16x1xf32>
      %42 = arith.addf %39, %41 : vector<16x1xf32>
      %c0_29 = arith.constant 0 : index
      %c0_30 = arith.constant 0 : index
      %43 = vector.load %arg9[%c0_29, %c0_30] : memref<16x1xf32, #tpu.memory_space<vmem>>, vector<16x1xf32>
      %44 = arith.subf %42, %43 : vector<16x1xf32>
      %cst_31 = arith.constant 0.000000e+00 : f32
      %45 = vector.broadcast %cst_31 : f32 to vector<16x1xf32>
      %46 = arith.cmpf one, %38, %45 : vector<16x1xf32>
      %cst_32 = arith.constant 0.000000e+00 : f32
      %47 = vector.broadcast %cst_32 : f32 to vector<16x1xf32>
      %48 = arith.select %46, %44, %47 : vector<16x1xi1>, vector<16x1xf32>
      %49 = arith.mulf %38, %48 : vector<16x1xf32>
      %50 = vector.shape_cast %49 : vector<16x1xf32> to vector<1x16x1xf32>
      %cst_33 = arith.constant dense<0.000000e+00> : vector<1xf32>
      %51 = vector.multi_reduction <add>, %50, %cst_33 [1, 2] : vector<1x16x1xf32> to vector<1xf32>
      %52 = vector.shape_cast %51 : vector<1xf32> to vector<1x1x1xf32>
      %53 = vector.extract %52[0, 0, 0] : f32 from vector<1x1x1xf32>
      %54 = vector.shape_cast %38 : vector<16x1xf32> to vector<1x16x1xf32>
      %cst_34 = arith.constant dense<0.000000e+00> : vector<1xf32>
      %55 = vector.multi_reduction <add>, %54, %cst_34 [1, 2] : vector<1x16x1xf32> to vector<1xf32>
      %56 = vector.shape_cast %55 : vector<1xf32> to vector<1x1x1xf32>
      %57 = vector.extract %56[0, 0, 0] : f32 from vector<1x1x1xf32>
      %58 = vector.broadcast %53 : f32 to vector<1x1x128xf32>
      %c0_35 = arith.constant 0 : index
      %c0_36 = arith.constant 0 : index
      %c0_37 = arith.constant 0 : index
      %59 = vector.load %arg5[%c0_35, %c0_36, %c0_37] : memref<1x1x128xf32, #tpu.memory_space<vmem>>, vector<1x1x128xf32>
      tpu.vector_store %arg5[%c0_35, %c0_36, %c0_37], %58 {strides = array<i32>} : memref<1x1x128xf32, #tpu.memory_space<vmem>>, vector<1x1x128xf32>,
      %60 = vector.broadcast %57 : f32 to vector<1x1x128xf32>
      %c0_38 = arith.constant 0 : index
      %c0_39 = arith.constant 0 : index
      %c0_40 = arith.constant 0 : index
      %61 = vector.load %arg6[%c0_38, %c0_39, %c0_40] : memref<1x1x128xf32, #tpu.memory_space<vmem>>, vector<1x1x128xf32>
      tpu.vector_store %arg6[%c0_38, %c0_39, %c0_40], %60 {strides = array<i32>} : memref<1x1x128xf32, #tpu.memory_space<vmem>>, vector<1x1x128xf32>,
    } else {
    }
    return
  }
  func.func @transform_0(%arg0: i32, %arg1: i32) -> (i32, i32) {
    %c0_i32 = arith.constant 0 : i32
    return %arg0, %arg1 : i32, i32
  }
  func.func @transform_1(%arg0: i32, %arg1: i32) -> (i32, i32) {
    %c0_i32 = arith.constant 0 : i32
    %c0_i32_0 = arith.constant 0 : i32
    return %arg0, %c0_i32 : i32, i32
  }
  func.func @transform_2(%arg0: i32, %arg1: i32) -> (i32, i32) {
    %c0_i32 = arith.constant 0 : i32
    %c0_i32_0 = arith.constant 0 : i32
    return %arg0, %c0_i32 : i32, i32
  }
  func.func @transform_3(%arg0: i32, %arg1: i32) -> (i32, i32, i32) {
    %c0_i32 = arith.constant 0 : i32
    %c0_i32_0 = arith.constant 0 : i32
    %c0_i32_1 = arith.constant 0 : i32
    return %arg0, %c0_i32, %c0_i32_0 : i32, i32, i32
  }
  func.func @transform_4(%arg0: i32, %arg1: i32) -> (i32, i32, i32) {
    %c0_i32 = arith.constant 0 : i32
    %c0_i32_0 = arith.constant 0 : i32
    %c0_i32_1 = arith.constant 0 : i32
    return %arg0, %c0_i32, %c0_i32_0 : i32, i32, i32
  }
}

</mosaic_0001>

<llo_original>
// kernel: _masked_ce_pallas.1
$region0: #{_masked_ce_pallas.1}
  #allocation0 [shape = 'u32[]', space=smem, size = 0x4, offset = 0x4, fixed_abs, tag = 'smem constant byte address 0x4 - core index']
  #allocation1 [shape = 'u32[144,128]{1,0:T(1,128)}', space=vmem, size = 0x12000, scoped, tag = 'internal scratch']
  #allocation2 [shape = 'f32[16,1]{1,0:T(8,128)}', space=vmem, size = 0x2000, scoped, tag = 'scratch operand']
  #allocation3 [shape = 'f32[16,1]{1,0:T(8,128)}', space=vmem, size = 0x2000, scoped, tag = 'scratch operand']
  #allocation4 [shape = 'f32[16,1]{1,0:T(8,128)}', space=vmem, size = 0x2000, scoped, tag = 'scratch operand']
  %s0 = inlined_call_operand.hbm [shape: f32[16,128], index: 0, kind: input, shape index: {}]
  %s1 = inlined_call_operand.hbm [shape: s32[16,1], index: 1, kind: input, shape index: {}]
  %s2 = inlined_call_operand.hbm [shape: f32[16,1], index: 2, kind: input, shape index: {}]
  %s3 = inlined_call_operand.hbm [shape: f32[1,1,128], index: 3, kind: output, shape index: {0}]
  %s4 = inlined_call_operand.hbm [shape: f32[1,1,128], index: 4, kind: output, shape index: {1}]
  %5 = xla_tuple %s3, %s4
  %s6 = sld [smem:[#allocation0]]
  $region50: #{_masked_ce_pallas.1} parent=0
    _
  %s8 = ssub.s32 1, %s6
  %s9 = scalar_select 0, %s8, %s6
  $region1: #{_masked_ce_pallas.1} parent=0
    #allocation5 [shape = 'u8[8192]{0}', space=vmem, size = 0x2000, scoped, tag = 'input window, operand 0, single buffered']
    #allocation6 [shape = 's32[1]{0}', space=sflag, size = 0x4, scoped, tag = 'scoped memory for _masked_ce_pallas.1']
    #allocation7 [shape = 's32[1]{0}', space=sflag, size = 0x4, scoped, tag = 'scoped memory for _masked_ce_pallas.1']
    #allocation8 [shape = 'u8[8192]{0}', space=vmem, size = 0x2000, scoped, tag = 'input window, operand 1, single buffered']
    #allocation9 [shape = 's32[1]{0}', space=sflag, size = 0x4, scoped, tag = 'scoped memory for _masked_ce_pallas.1']
    #allocation10 [shape = 'u8[8192]{0}', space=vmem, size = 0x2000, scoped, tag = 'input window, operand 2, single buffered']
    #allocation11 [shape = 'u8[512]{0}', space=vmem, size = 0x400, scoped, tag = 'output window, operand 0, single buffered']
    #allocation12 [shape = 'u8[512]{0}', space=vmem, size = 0x400, scoped, tag = 'output window, operand 1, single buffered']
    #allocation13 [shape = 's32[1]{0}', space=sflag, size = 0x4, scoped, tag = 'scoped memory for _masked_ce_pallas.1']
    %10 = vsyncpa [#allocation6], 0
    %11 = vsyncpa [#allocation9], 0
    %12 = vsyncpa [#allocation7], 0
    %13 = vsyncpa [#allocation13], 0
    // Predicated region
    $region2: #{_masked_ce_pallas.1} parent=1 // pred_check
      _
    $region3: #{_masked_ce_pallas.1} parent=1 // pred_check_branch
      %15 = sbr.rel (0) target = $region5
    $region4: #{_masked_ce_pallas.1} parent=1 // pred_region
      %s17 = ssub.s32 256, 256
      %18 = vsyncadd [#allocation6], %s17
      %s19 = sshll.u32 [#allocation5], 4
      %s20 = int_to_ptr.vmem [resolvable:$true] %s19
      %25 = dma.hbm_to_vmem [thread:$0]  %s0, 256, %s20, [#allocation6], 128, 128, 8
    $region5: #{_masked_ce_pallas.1} parent=1 // pred_fallthru
      _
    // Predicated region
    $region6: #{_masked_ce_pallas.1} parent=1 // pred_check
      _
    $region7: #{_masked_ce_pallas.1} parent=1 // pred_check_branch
      %27 = sbr.rel (0) target = $region9
    $region8: #{_masked_ce_pallas.1} parent=1 // pred_region
      %s29 = ssub.s32 256, 256
      %30 = vsyncadd [#allocation9], %s29
      %s31 = sshll.u32 [#allocation8], 4
      %s32 = int_to_ptr.vmem [resolvable:$true] %s31
      %37 = dma.hbm_to_vmem [thread:$0]  %s1, 256, %s32, [#allocation9], 128, 128, 8
    $region9: #{_masked_ce_pallas.1} parent=1 // pred_fallthru
      _
    // Predicated region
    $region10: #{_masked_ce_pallas.1} parent=1 // pred_check
      _
    $region11: #{_masked_ce_pallas.1} parent=1 // pred_check_branch
      %39 = sbr.rel (0) target = $region13
    $region12: #{_masked_ce_pallas.1} parent=1 // pred_region
      %s41 = ssub.s32 256, 256
      %42 = vsyncadd [#allocation9], %s41
      %s43 = sshll.u32 [#allocation10], 4
      %s44 = int_to_ptr.vmem [resolvable:$true] %s43
      %49 = dma.hbm_to_vmem [thread:$0]  %s2, 256, %s44, [#allocation9], 128, 128, 8
    $region13: #{_masked_ce_pallas.1} parent=1 // pred_fallthru
      _
    // Predicated region
    $region14: #{_masked_ce_pallas.1} parent=1 // pred_check
      _
    $region15: #{_masked_ce_pallas.1} parent=1 // pred_check_branch
      %51 = sbr.rel (0) target = $region17
    $region16: #{_masked_ce_pallas.1} parent=1 // pred_region
      %52 = dma.done [#allocation6], 256
    $region17: #{_masked_ce_pallas.1} parent=1 // pred_fallthru
      _
    // Predicated region
    $region18: #{_masked_ce_pallas.1} parent=1 // pred_check
      _
    $region19: #{_masked_ce_pallas.1} parent=1 // pred_check_branch
      %54 = sbr.rel (0) target = $region21
    $region20: #{_masked_ce_pallas.1} parent=1 // pred_region
      %55 = dma.done [#allocation9], 256
    $region21: #{_masked_ce_pallas.1} parent=1 // pred_fallthru
      _
    // Predicated region
    $region22: #{_masked_ce_pallas.1} parent=1 // pred_check
      _
    $region23: #{_masked_ce_pallas.1} parent=1 // pred_check_branch
      %57 = sbr.rel (0) target = $region25
    $region24: #{_masked_ce_pallas.1} parent=1 // pred_region
      %58 = dma.done [#allocation9], 256
    $region25: #{_masked_ce_pallas.1} parent=1 // pred_fallthru
      _
    %p59 = scmp.eq.s32.totalorder 0, 0
    // Predicated region
    $region26: #{_masked_ce_pallas.1} parent=1 // pred_check
      %p60 = pneg %p59
    $region27: #{_masked_ce_pallas.1} parent=1 // pred_check_branch
      %62 = sbr.rel (%p60) target = $region29
    $region28: #{_masked_ce_pallas.1} parent=1 // pred_region
      %vm63 = vcmask 7168
      %64 = vst.msk [vmem:[#allocation2] sm:$0xff] %vm63, -inf
      %65 = vst.msk [vmem:[#allocation2 + $0x8] sm:$0xff] %vm63, -inf
      %66 = vst.msk [vmem:[#allocation3] sm:$0xff] %vm63, 0.0
      %67 = vst.msk [vmem:[#allocation3 + $0x8] sm:$0xff] %vm63, 0.0
      %68 = vst.msk [vmem:[#allocation4] sm:$0xff] %vm63, 0.0
      %69 = vst.msk [vmem:[#allocation4 + $0x8] sm:$0xff] %vm63, 0.0
    $region29: #{_masked_ce_pallas.1} parent=1 // pred_fallthru
      _
    %v70 = vld [vmem:[#allocation5] sm:$0xff]
    %v71 = vld [vmem:[#allocation5 + $0x8] sm:$0xff]
    %v72 = vld [vmem:[#allocation8] sm:$0xff]
    %v73 = vld [vmem:[#allocation8 + $0x8] sm:$0xff]
    %v74 = vlaneseq
    %v75 = vand.u32 %v74, 127
    %s76 = smul.u32 0, 128
    %v77 = vstv %s76
    %v78 = vadd.s32 %v75, %v77
    %79 = vset.pattern.permute.xlu0 0
    %80 = vperm.xlu0 %79, %v72
    %v81 = vpop.permute.xlu0 %80
    %82 = vset.pattern.permute.xlu0 0
    %83 = vperm.xlu0 %82, %v73
    %v84 = vpop.permute.xlu0 %83
    %vm85 = vcmp.eq.s32.totalorder %v78, %v81
    %vm86 = vcmp.eq.s32.totalorder %v78, %v84
    %v87 = vsel %vm85, %v70, 0.0
    %v88 = vsel %vm86, %v71, 0.0
    %89 = vadd.xlane.f32.xlu0 %v87
    %v90 = vpop.xlane.xlu0 %89
    %91 = vadd.xlane.f32.xlu0 %v88
    %v92 = vpop.xlane.xlu0 %91
    %v93 = vld [vmem:[#allocation4] sm:$0xff]
    %v94 = vld [vmem:[#allocation4 + $0x8] sm:$0xff]
    %v95 = vadd.f32 %v93, %v90
    %v96 = vadd.f32 %v94, %v92
    %vm97 = vcmask 7168
    %98 = vst.msk [vmem:[#allocation4] sm:$0xff] %vm97, %v95
    %99 = vst.msk [vmem:[#allocation4 + $0x8] sm:$0xff] %vm97, %v96
    %100 = vmax.xlane.f32.xlu0 %v70
    %v101 = vpop.xlane.xlu0 %100
    %102 = vmax.xlane.f32.xlu0 %v71
    %v103 = vpop.xlane.xlu0 %102
    %v104 = vld [vmem:[#allocation2] sm:$0xff]
    %v105 = vld [vmem:[#allocation2 + $0x8] sm:$0xff]
    %v106 = vmax.f32 %v104, %v101
    %v107 = vmax.f32 %v105, %v103
    %109 = vset.pattern.permute.xlu0 0
    %110 = vperm.xlu0 %109, %v106
    %v111 = vpop.permute.xlu0 %110
    %114 = vset.pattern.permute.xlu0 0
    %115 = vperm.xlu0 %114, %v107
    %v116 = vpop.permute.xlu0 %115
    %v118 = vsub.f32 %v70, %v111
    %v119 = vsub.f32 %v71, %v116
    %v120 = vld [vmem:[#allocation3] sm:$0xff]
    %v121 = vld [vmem:[#allocation3 + $0x8] sm:$0xff]
    %v122 = vsub.f32 %v104, %v106
    %v123 = vsub.f32 %v105, %v107
    %v124 = vmul.f32 %v122, 1.442695
    %v125 = vpow.pop %v124
    %v126 = vmul.f32 %v123, 1.442695
    %v127 = vpow.pop %v126
    %v128 = vmul.f32 %v120, %v125
    %v129 = vmul.f32 %v121, %v127
    %v130 = vmul.f32 %v118, 1.442695
    %v131 = vpow.pop %v130
    %v132 = vmul.f32 %v119, 1.442695
    %v133 = vpow.pop %v132
    %134 = vadd.xlane.f32.xlu0 %v131
    %v135 = vpop.xlane.xlu0 %134
    %136 = vadd.xlane.f32.xlu0 %v133
    %v137 = vpop.xlane.xlu0 %136
    %v138 = vadd.f32 %v128, %v135
    %v139 = vadd.f32 %v129, %v137
    %140 = vst.msk [vmem:[#allocation3] sm:$0xff] %vm97, %v138
    %141 = vst.msk [vmem:[#allocation3 + $0x8] sm:$0xff] %vm97, %v139
    %142 = vst.msk [vmem:[#allocation2] sm:$0xff] %vm97, %v106
    %143 = vst.msk [vmem:[#allocation2 + $0x8] sm:$0xff] %vm97, %v107
    // Predicated region
    $region30: #{_masked_ce_pallas.1} parent=1 // pred_check
      %p144 = pneg %p59
    $region31: #{_masked_ce_pallas.1} parent=1 // pred_check_branch
      %146 = sbr.rel (%p144) target = $region33
    $region32: #{_masked_ce_pallas.1} parent=1 // pred_region
      %v147 = vld [vmem:[#allocation10] sm:$0xff]
      %v148 = vld [vmem:[#allocation10 + $0x8] sm:$0xff]
      %v149 = vld [vmem:[#allocation2] sm:$0xff]
      %v150 = vld [vmem:[#allocation2 + $0x8] sm:$0xff]
      %v151 = vld [vmem:[#allocation3] sm:$0xff]
      %v152 = vld [vmem:[#allocation3 + $0x8] sm:$0xff]
      %v153 = vlog2.pop %v151
      %v154 = vmul.f32 %v153, 0.6931472
      %v155 = vlog2.pop %v152
      %v156 = vmul.f32 %v155, 0.6931472
      %v157 = vadd.f32 %v149, %v154
      %v158 = vadd.f32 %v150, %v156
      %v159 = vld [vmem:[#allocation4] sm:$0xff]
      %v160 = vld [vmem:[#allocation4 + $0x8] sm:$0xff]
      %v161 = vsub.f32 %v157, %v159
      %v162 = vsub.f32 %v158, %v160
      %vm163 = vcmp.ne.f32.partialorder %v147, 0.0
      %vm164 = vcmp.ne.f32.partialorder %v148, 0.0
      %v165 = vsel %vm163, %v161, 0.0
      %v166 = vsel %vm164, %v162, 0.0
      %v167 = vmul.f32 %v147, %v165
      %v168 = vmul.f32 %v148, %v166
      %v169 = vsel %vm97, %v167, 0.0
      %v170 = vsel %vm97, %v168, 0.0
      %v171 = vadd.f32 %v169, %v170
      %172 = vadd.xlane.f32.xlu0 %v171
      %v173 = vpop.xlane.xlu0 %172
      %v174 = vrot.slane %v173, 4
      %v175 = vadd.f32 %v173, %v174
      %v176 = vrot.slane %v175, 2
      %v177 = vadd.f32 %v175, %v176
      %v178 = vrot.slane %v177, 1
      %v179 = vadd.f32 %v177, %v178
      %s180 = vtos %v179
      %v181 = vsel %vm97, %v147, 0.0
      %v182 = vsel %vm97, %v148, 0.0
      %v183 = vadd.f32 %v181, %v182
      %184 = vadd.xlane.f32.xlu0 %v183
      %v185 = vpop.xlane.xlu0 %184
      %v186 = vrot.slane %v185, 4
      %v187 = vadd.f32 %v185, %v186
      %v188 = vrot.slane %v187, 2
      %v189 = vadd.f32 %v187, %v188
      %v190 = vrot.slane %v189, 1
      %v191 = vadd.f32 %v189, %v190
      %s192 = vtos %v191
      %v193 = vstv %s180
      %194 = vst [vmem:[#allocation11] sm:$0x1] %v193
      %v195 = vstv %s192
      %196 = vst [vmem:[#allocation12] sm:$0x1] %v195
    $region33: #{_masked_ce_pallas.1} parent=1 // pred_fallthru
      _
    // Predicated region
    $region34: #{_masked_ce_pallas.1} parent=1 // pred_check
      _
    $region35: #{_masked_ce_pallas.1} parent=1 // pred_check_branch
      %198 = sbr.rel (0) target = $region37
    $region36: #{_masked_ce_pallas.1} parent=1 // pred_region
      %s200 = ssub.s32 16, 16
      %201 = vsyncadd [#allocation7], %s200
      %s203 = sshll.u32 [#allocation11], 4
      %s204 = int_to_ptr.vmem [resolvable:$true] %s203
      %206 = dma.vmem_to_hbm [thread:$0]  %s204, 16, %s3, [#allocation7]
    $region37: #{_masked_ce_pallas.1} parent=1 // pred_fallthru
      _
    // Predicated region
    $region38: #{_masked_ce_pallas.1} parent=1 // pred_check
      _
    $region39: #{_masked_ce_pallas.1} parent=1 // pred_check_branch
      %208 = sbr.rel (0) target = $region41
    $region40: #{_masked_ce_pallas.1} parent=1 // pred_region
      %s210 = ssub.s32 16, 16
      %211 = vsyncadd [#allocation13], %s210
      %s213 = sshll.u32 [#allocation12], 4
      %s214 = int_to_ptr.vmem [resolvable:$true] %s213
      %216 = dma.vmem_to_hbm [thread:$0]  %s214, 16, %s4, [#allocation13]
    $region41: #{_masked_ce_pallas.1} parent=1 // pred_fallthru
      _
    // Predicated region
    $region42: #{_masked_ce_pallas.1} parent=1 // pred_check
      _
    $region43: #{_masked_ce_pallas.1} parent=1 // pred_check_branch
      %218 = sbr.rel (0) target = $region45
    $region44: #{_masked_ce_pallas.1} parent=1 // pred_region
      %219 = dma.done [#allocation7], 16
    $region45: #{_masked_ce_pallas.1} parent=1 // pred_fallthru
      _
    // Predicated region
    $region46: #{_masked_ce_pallas.1} parent=1 // pred_check
      _
    $region47: #{_masked_ce_pallas.1} parent=1 // pred_check_branch
      %221 = sbr.rel (0) target = $region49
    $region48: #{_masked_ce_pallas.1} parent=1 // pred_region
      %222 = dma.done [#allocation13], 16
    $region49: #{_masked_ce_pallas.1} parent=1 // pred_fallthru
      _
    %223 = vsyncpa [#allocation6], 1
    %224 = vsyncpa [#allocation9], 1
    %225 = vsyncpa [#allocation7], 1
    %226 = vsyncpa [#allocation13], 1

</llo_original>
